<compile_context>
chip_gen: v7x
topology: tpu7x:2x2x1
jax: 0.10.0
libtpu: 0.0.40
codegen_flags: <defaults>
</compile_context>

<pallas_src>
import functools

import jax
import jax.numpy as jnp
from jax.experimental import pallas as pl
from jax.experimental.pallas import tpu as pltpu


def _sigmoid(z):
    # explicit form so kernel and reference use identical math
    return 1.0 / (1.0 + jnp.exp(-z))


# ---------------------------------------------------------------------------
# EvoNorm-S0
# ---------------------------------------------------------------------------
def evonorm_s0_kernel(x_ref, v_ref, w_ref, b_ref, o_ref, *, eps):
    # x_ref: (1, G, Cg, HW) VMEM   v/w/b: (1, G, Cg, 1) VMEM (resident, const index)
    x = x_ref[...].astype(jnp.float32)
    _, g, cg, hw = x_ref.shape
    m = cg * hw

    # per-(sample, group) unbiased variance over (Cg, HW)  [torch.var default]
    s = jnp.sum(jnp.sum(x, axis=3, keepdims=True), axis=2, keepdims=True)    # (1,G,1,1)
    mean = s * (1.0 / m)
    d = x - mean
    ss = jnp.sum(jnp.sum(d * d, axis=3, keepdims=True), axis=2, keepdims=True)
    var = ss * (1.0 / max(m - 1, 1))
    inv_std = jax.lax.rsqrt(var + eps)                                        # EUP

    v = v_ref[...].astype(jnp.float32)
    w = w_ref[...].astype(jnp.float32)
    b = b_ref[...].astype(jnp.float32)

    y = x * _sigmoid(v * x) * inv_std * w + b
    o_ref[...] = y.astype(o_ref.dtype)


def evo_norm_s0(x, v, weight, bias, *, groups, eps=1e-5):
    n, c, h, w = x.shape
    assert c % groups == 0, (c, groups)
    g, cg, hw = groups, c // groups, h * w

    xr = x.reshape(n, g, cg, hw)            # contiguous reshape: free
    vr = v.reshape(1, g, cg, 1)
    wr = weight.reshape(1, g, cg, 1)
    br = bias.reshape(1, g, cg, 1)

    kernel = functools.partial(evonorm_s0_kernel, eps=float(eps))
    param_spec = pl.BlockSpec((1, g, cg, 1), lambda i: (0, 0, 0, 0))
    out = pl.pallas_call(
        kernel,
        out_shape=jax.ShapeDtypeStruct((n, g, cg, hw), x.dtype),
        grid=(n,),
        in_specs=[
            pl.BlockSpec((1, g, cg, hw), lambda i: (i, 0, 0, 0)),
            param_spec, param_spec, param_spec,
        ],
        out_specs=pl.BlockSpec((1, g, cg, hw), lambda i: (i, 0, 0, 0)),
        compiler_params=pltpu.CompilerParams(dimension_semantics=("parallel",)),
    )(xr, vr, wr, br)
    return out.reshape(n, c, h, w)


# ---------------------------------------------------------------------------
# EvoNorm-B0 (eval-mode statistics)
# ---------------------------------------------------------------------------
def evonorm_b0_kernel(x_ref, rv_ref, v_ref, w_ref, b_ref, o_ref, *, eps):
    # x_ref: (1, C, HW) VMEM   rv/v/w/b: (1, C, 1) VMEM
    x = x_ref[...].astype(jnp.float32)
    _, c, hw = x_ref.shape

    # per-(sample, channel) unbiased variance over HW
    s = jnp.sum(x, axis=2, keepdims=True)                                     # (1,C,1)
    mean = s * (1.0 / hw)
    d = x - mean
    var = jnp.sum(d * d, axis=2, keepdims=True) * (1.0 / max(hw - 1, 1))
    inst_std = jnp.sqrt(var + eps)                                            # (1,C,1)

    rv = rv_ref[...].astype(jnp.float32)
    v = v_ref[...].astype(jnp.float32)
    w = w_ref[...].astype(jnp.float32)
    b = b_ref[...].astype(jnp.float32)

    den = jnp.maximum(jnp.sqrt(rv + eps), v * x + inst_std)
    y = x / den * w + b
    o_ref[...] = y.astype(o_ref.dtype)


def evo_norm_b0(x, running_var, v, weight, bias, *, eps=1e-5):
    n, c, h, w = x.shape
    hw = h * w

    xr = x.reshape(n, c, hw)
    rvr = running_var.reshape(1, c, 1)
    vr = v.reshape(1, c, 1)
    wr = weight.reshape(1, c, 1)
    br = bias.reshape(1, c, 1)

    kernel = functools.partial(evonorm_b0_kernel, eps=float(eps))
    param_spec = pl.BlockSpec((1, c, 1), lambda i: (0, 0, 0))
    out = pl.pallas_call(
        kernel,
        out_shape=jax.ShapeDtypeStruct((n, c, hw), x.dtype),
        grid=(n,),
        in_specs=[
            pl.BlockSpec((1, c, hw), lambda i: (i, 0, 0)),
            param_spec, param_spec, param_spec, param_spec,
        ],
        out_specs=pl.BlockSpec((1, c, hw), lambda i: (i, 0, 0)),
        compiler_params=pltpu.CompilerParams(dimension_semantics=("parallel",)),
    )(xr, rvr, vr, wr, br)
    return out.reshape(n, c, h, w)


# ---------------------------------------------------------------------------
# _EvoNorm.forward equivalent
# ---------------------------------------------------------------------------
def evo_norm(x, prefix, running_var, v, weight, bias, *, training=False,
             momentum=0.9, eps=1e-5, groups=32):
    assert x.ndim == 4, "expected 4D input"
    assert prefix in ("s0", "b0")
    if prefix == "s0":
        return evo_norm_s0(x, v, weight, bias, groups=groups, eps=eps)
    # TODO(synk): 'b0' training mode also updates the running_var buffer in place
    # (running_var = momentum*running_var + (1-momentum)*batch_var); that stateful
    # nn buffer update has no clean functional Pallas equivalent, so eval-mode
    # statistics (running_var) are used here.
    return evo_norm_b0(x, running_var, v, weight, bias, eps=eps)


# ---------------------------------------------------------------------------
# Pure-JAX references (mirror torch-toolbox F.evo_norm, unbiased torch.var)
# ---------------------------------------------------------------------------
def evo_norm_s0_reference(x, v, weight, bias, *, groups, eps=1e-5):
    n, c, h, w = x.shape
    cg = c // groups
    xf = x.astype(jnp.float32)
    xg = xf.reshape(n, groups, cg, h, w)
    var = jnp.var(xg, axis=(2, 3, 4), keepdims=True, ddof=1)
    std = jnp.broadcast_to(jnp.sqrt(var + eps), xg.shape).reshape(n, c, h, w)
    y = xf * _sigmoid(v.astype(jnp.float32) * xf) / std * weight + bias
    return y.astype(x.dtype)


def evo_norm_b0_reference(x, running_var, v, weight, bias, *, eps=1e-5):
    xf = x.astype(jnp.float32)
    var = jnp.var(xf, axis=(2, 3), keepdims=True, ddof=1)
    inst_std = jnp.sqrt(var + eps)
    den = jnp.maximum(jnp.sqrt(running_var.astype(jnp.float32) + eps),
                      v.astype(jnp.float32) * xf + inst_std)
    y = xf / den * weight + bias
    return y.astype(x.dtype)


if __name__ == "__main__":
    key = jax.random.PRNGKey(0)
    kx, kv, kw, kb, krv = jax.random.split(key, 5)

    N, C, H, W = 2, 32, 16, 16
    groups = 8           # must divide num_features
    eps = 1e-5

    x = jax.random.normal(kx, (N, C, H, W), dtype=jnp.float32)
    # affine parameters (module init is ones/zeros/ones; perturbed so the check is meaningful)
    v = 1.0 + 0.1 * jax.random.normal(kv, (1, C, 1, 1), dtype=jnp.float32)
    weight = 1.0 + 0.1 * jax.random.normal(kw, (1, C, 1, 1), dtype=jnp.float32)
    bias = 0.1 * jax.random.normal(kb, (1, C, 1, 1), dtype=jnp.float32)
    running_var = 1.0 + 0.1 * jax.random.uniform(krv, (1, C, 1, 1), dtype=jnp.float32)

    # EvoNorm-S0
    out_s0 = evo_norm(x, "s0", running_var, v, weight, bias, groups=groups, eps=eps)
    out_s0 = jax.block_until_ready(out_s0)
    ref_s0 = evo_norm_s0_reference(x, v, weight, bias, groups=groups, eps=eps)
    assert out_s0.shape == x.shape
    assert jnp.allclose(out_s0, ref_s0, atol=1e-4, rtol=1e-4), \
        float(jnp.max(jnp.abs(out_s0 - ref_s0)))

    # EvoNorm-B0 (eval-mode statistics)
    out_b0 = evo_norm(x, "b0", running_var, v, weight, bias, eps=eps)
    out_b0 = jax.block_until_ready(out_b0)
    ref_b0 = evo_norm_b0_reference(x, running_var, v, weight, bias, eps=eps)
    assert out_b0.shape == x.shape
    assert jnp.allclose(out_b0, ref_b0, atol=1e-4, rtol=1e-4), \
        float(jnp.max(jnp.abs(out_b0 - ref_b0)))

    print("KERNEL_OK")
</pallas_src>

<mosaic_0001>
module attributes {stable_mosaic.version = 11 : i64} {
  func.func @evonorm_s0_kernel(%arg0: i32, %arg1: memref<1x8x4x256xf32, #tpu.memory_space<vmem>>, %arg2: memref<1x8x4x1xf32, #tpu.memory_space<vmem>>, %arg3: memref<1x8x4x1xf32, #tpu.memory_space<vmem>>, %arg4: memref<1x8x4x1xf32, #tpu.memory_space<vmem>>, %arg5: memref<1x8x4x256xf32, #tpu.memory_space<vmem>>) attributes {dimension_semantics = [#tpu.dimension_semantics<parallel>], iteration_bounds = array<i64: 2>, scalar_prefetch = 0 : i64, scratch_operands = 0 : i64, tpu.core_type = #tpu.core_type<tc>, window_params = [{transform_indices = @transform_0, window_bounds = array<i64: 1, 8, 4, 256>}, {pipeline_mode = #tpu.pipeline_mode<synchronous>, transform_indices = @transform_1, window_bounds = array<i64: 1, 8, 4, 1>}, {pipeline_mode = #tpu.pipeline_mode<synchronous>, transform_indices = @transform_2, window_bounds = array<i64: 1, 8, 4, 1>}, {pipeline_mode = #tpu.pipeline_mode<synchronous>, transform_indices = @transform_3, window_bounds = array<i64: 1, 8, 4, 1>}, {transform_indices = @transform_4, window_bounds = array<i64: 1, 8, 4, 256>}]} {
    %c0 = arith.constant 0 : index
    %c0_0 = arith.constant 0 : index
    %c0_1 = arith.constant 0 : index
    %c0_2 = arith.constant 0 : index
    %0 = vector.load %arg1[%c0, %c0_0, %c0_1, %c0_2] : memref<1x8x4x256xf32, #tpu.memory_space<vmem>>, vector<1x8x4x256xf32>
    %cst = arith.constant dense<0.000000e+00> : vector<1x8x4xf32>
    %1 = vector.multi_reduction <add>, %0, %cst [3] : vector<1x8x4x256xf32> to vector<1x8x4xf32>
    %2 = vector.shape_cast %1 : vector<1x8x4xf32> to vector<1x8x4x1xf32>
    %cst_3 = arith.constant dense<0.000000e+00> : vector<1x8x1xf32>
    %3 = vector.multi_reduction <add>, %2, %cst_3 [2] : vector<1x8x4x1xf32> to vector<1x8x1xf32>
    %4 = vector.shape_cast %3 : vector<1x8x1xf32> to vector<1x8x1x1xf32>
    %cst_4 = arith.constant 9.765625E-4 : f32
    %5 = vector.broadcast %cst_4 : f32 to vector<1x8x1x1xf32>
    %6 = arith.mulf %4, %5 : vector<1x8x1x1xf32>
    %7 = vector.broadcast %6 : vector<1x8x1x1xf32> to vector<1x8x4x256xf32>
    %8 = arith.subf %0, %7 : vector<1x8x4x256xf32>
    %9 = arith.mulf %8, %8 : vector<1x8x4x256xf32>
    %cst_5 = arith.constant dense<0.000000e+00> : vector<1x8x4xf32>
    %10 = vector.multi_reduction <add>, %9, %cst_5 [3] : vector<1x8x4x256xf32> to vector<1x8x4xf32>
    %11 = vector.shape_cast %10 : vector<1x8x4xf32> to vector<1x8x4x1xf32>
    %cst_6 = arith.constant dense<0.000000e+00> : vector<1x8x1xf32>
    %12 = vector.multi_reduction <add>, %11, %cst_6 [2] : vector<1x8x4x1xf32> to vector<1x8x1xf32>
    %13 = vector.shape_cast %12 : vector<1x8x1xf32> to vector<1x8x1x1xf32>
    %cst_7 = arith.constant 9.77517105E-4 : f32
    %14 = vector.broadcast %cst_7 : f32 to vector<1x8x1x1xf32>
    %15 = arith.mulf %13, %14 : vector<1x8x1x1xf32>
    %cst_8 = arith.constant 9.99999974E-6 : f32
    %16 = vector.broadcast %cst_8 : f32 to vector<1x8x1x1xf32>
    %17 = arith.addf %15, %16 : vector<1x8x1x1xf32>
    %18 = math.rsqrt %17 : vector<1x8x1x1xf32>
    %c0_9 = arith.constant 0 : index
    %c0_10 = arith.constant 0 : index
    %c0_11 = arith.constant 0 : index
    %c0_12 = arith.constant 0 : index
    %19 = vector.load %arg2[%c0_9, %c0_10, %c0_11, %c0_12] : memref<1x8x4x1xf32, #tpu.memory_space<vmem>>, vector<1x8x4x1xf32>
    %c0_13 = arith.constant 0 : index
    %c0_14 = arith.constant 0 : index
    %c0_15 = arith.constant 0 : index
    %c0_16 = arith.constant 0 : index
    %20 = vector.load %arg3[%c0_13, %c0_14, %c0_15, %c0_16] : memref<1x8x4x1xf32, #tpu.memory_space<vmem>>, vector<1x8x4x1xf32>
    %c0_17 = arith.constant 0 : index
    %c0_18 = arith.constant 0 : index
    %c0_19 = arith.constant 0 : index
    %c0_20 = arith.constant 0 : index
    %21 = vector.load %arg4[%c0_17, %c0_18, %c0_19, %c0_20] : memref<1x8x4x1xf32, #tpu.memory_space<vmem>>, vector<1x8x4x1xf32>
    %22 = vector.broadcast %19 : vector<1x8x4x1xf32> to vector<1x8x4x256xf32>
    %23 = arith.mulf %22, %0 : vector<1x8x4x256xf32>
    %cst_21 = arith.constant 0.000000e+00 : f32
    %24 = vector.broadcast %cst_21 : f32 to vector<1x8x4x256xf32>
    %25 = arith.subf %24, %23 : vector<1x8x4x256xf32>
    %26 = math.exp %25 : vector<1x8x4x256xf32>
    %cst_22 = arith.constant 1.000000e+00 : f32
    %27 = vector.broadcast %cst_22 : f32 to vector<1x8x4x256xf32>
    %28 = arith.addf %27, %26 : vector<1x8x4x256xf32>
    %cst_23 = arith.constant 1.000000e+00 : f32
    %29 = vector.broadcast %cst_23 : f32 to vector<1x8x4x256xf32>
    %30 = arith.divf %29, %28 : vector<1x8x4x256xf32>
    %31 = arith.mulf %0, %30 : vector<1x8x4x256xf32>
    %32 = vector.broadcast %18 : vector<1x8x1x1xf32> to vector<1x8x4x256xf32>
    %33 = arith.mulf %31, %32 : vector<1x8x4x256xf32>
    %34 = vector.broadcast %20 : vector<1x8x4x1xf32> to vector<1x8x4x256xf32>
    %35 = arith.mulf %33, %34 : vector<1x8x4x256xf32>
    %36 = vector.broadcast %21 : vector<1x8x4x1xf32> to vector<1x8x4x256xf32>
    %37 = arith.addf %35, %36 : vector<1x8x4x256xf32>
    %c0_24 = arith.constant 0 : index
    %c0_25 = arith.constant 0 : index
    %c0_26 = arith.constant 0 : index
    %c0_27 = arith.constant 0 : index
    %38 = vector.load %arg5[%c0_24, %c0_25, %c0_26, %c0_27] : memref<1x8x4x256xf32, #tpu.memory_space<vmem>>, vector<1x8x4x256xf32>
    tpu.vector_store %arg5[%c0_24, %c0_25, %c0_26, %c0_27], %37 {strides = array<i32>} : memref<1x8x4x256xf32, #tpu.memory_space<vmem>>, vector<1x8x4x256xf32>,
    return
  }
  func.func @transform_0(%arg0: i32) -> (i32, i32, i32, i32) {
    %c0_i32 = arith.constant 0 : i32
    %c0_i32_0 = arith.constant 0 : i32
    %c0_i32_1 = arith.constant 0 : i32
    %c0_i32_2 = arith.constant 0 : i32
    return %arg0, %c0_i32, %c0_i32_0, %c0_i32_1 : i32, i32, i32, i32
  }
  func.func @transform_1(%arg0: i32) -> (i32, i32, i32, i32) {
    %c0_i32 = arith.constant 0 : i32
    %c0_i32_0 = arith.constant 0 : i32
    %c0_i32_1 = arith.constant 0 : i32
    %c0_i32_2 = arith.constant 0 : i32
    %c0_i32_3 = arith.constant 0 : i32
    return %c0_i32, %c0_i32_0, %c0_i32_1, %c0_i32_2 : i32, i32, i32, i32
  }
  func.func @transform_2(%arg0: i32) -> (i32, i32, i32, i32) {
    %c0_i32 = arith.constant 0 : i32
    %c0_i32_0 = arith.constant 0 : i32
    %c0_i32_1 = arith.constant 0 : i32
    %c0_i32_2 = arith.constant 0 : i32
    %c0_i32_3 = arith.constant 0 : i32
    return %c0_i32, %c0_i32_0, %c0_i32_1, %c0_i32_2 : i32, i32, i32, i32
  }
  func.func @transform_3(%arg0: i32) -> (i32, i32, i32, i32) {
    %c0_i32 = arith.constant 0 : i32
    %c0_i32_0 = arith.constant 0 : i32
    %c0_i32_1 = arith.constant 0 : i32
    %c0_i32_2 = arith.constant 0 : i32
    %c0_i32_3 = arith.constant 0 : i32
    return %c0_i32, %c0_i32_0, %c0_i32_1, %c0_i32_2 : i32, i32, i32, i32
  }
  func.func @transform_4(%arg0: i32) -> (i32, i32, i32, i32) {
    %c0_i32 = arith.constant 0 : i32
    %c0_i32_0 = arith.constant 0 : i32
    %c0_i32_1 = arith.constant 0 : i32
    %c0_i32_2 = arith.constant 0 : i32
    return %arg0, %c0_i32, %c0_i32_0, %c0_i32_1 : i32, i32, i32, i32
  }
}

</mosaic_0001>

<llo_original>
// kernel: tpu_custom_call.1
$region0: #{tpu_custom_call.1}
  #allocation0 [shape = 'u32[]', space=smem, size = 0x4, offset = 0x4, fixed_abs, tag = 'smem constant byte address 0x4 - core index']
  #allocation1 [shape = 'u32[144,128]{1,0:T(1,128)}', space=vmem, size = 0x12000, scoped, tag = 'internal scratch']
  %s0 = inlined_call_operand.hbm [shape: f32[2,8,4,256], index: 0, kind: input, shape index: {}]
  %s1 = inlined_call_operand.vmem [shape: f32[1,8,4,1], index: 1, kind: input, shape index: {}]
  %s2 = inlined_call_operand.vmem [shape: f32[1,8,4,1], index: 2, kind: input, shape index: {}]
  %s3 = inlined_call_operand.vmem [shape: f32[1,8,4,1], index: 3, kind: input, shape index: {}]
  %s4 = inlined_call_operand.hbm [shape: f32[2,8,4,256], index: 4, kind: output, shape index: {}]
  %s5 = sld [smem:[#allocation0]]
  $region53: #{tpu_custom_call.1} parent=0
    _
  %s7 = ssub.s32 1, %s5
  %s8 = scalar_select 0, %s7, %s5
  $region1: #{tpu_custom_call.1} parent=0
    #allocation2 [shape = 'u8[65536]{0}', space=vmem, size = 0x10000, scoped, tag = 'input window, operand 0']
    #allocation3 [shape = 's32[2]{0}', space=sflag, size = 0x8, scoped, tag = 'scoped memory for tpu_custom_call.1']
    #allocation4 [shape = 's32[2]{0}', space=sflag, size = 0x8, scoped, tag = 'scoped memory for tpu_custom_call.1']
    #allocation5 [shape = 'u8[65536]{0}', space=vmem, size = 0x10000, scoped, tag = 'output window, operand 0']
    %9 = vsyncpa [#allocation3], 0
    %s10 = scalar_lea.sflag [#allocation3], 1
    %11 = vsyncpa %s10, 0
    %12 = vsyncpa [#allocation4], 0
    %s13 = scalar_lea.sflag [#allocation4], 1
    %14 = vsyncpa %s13, 0
    loop: start=0, step=1, limit=4
    $region2: #{tpu_custom_call.1} parent=1 // loop_pre_header
      _
    $region3: #{tpu_custom_call.1} parent=1 // loop_header
      %s16 = sphi 0, %s20
      %p17 = scmp.ge.s32.totalorder %s16, 4
      %s26 = sphi 0, %s28
      %s29 = sphi 0, %s26
      %s30 = sphi 0, %s29
      %s46 = sphi 0, %s30
      %s50 = sphi 0, %s50
      %s52 = sphi 0, %s50
      %s53 = sphi 0, %s52
      %s67 = sphi 0, %s53
      %s71 = sphi 0, %s71
      %s73 = sphi 0, %s71
      %s74 = sphi 0, %s73
      %s88 = sphi 0, %s74
      %s92 = sphi 0, %s92
      %s94 = sphi 0, %s92
      %s95 = sphi 0, %s94
      %s109 = sphi 0, %s95
      %s115 = sphi 0, %s117
      %s118 = sphi 0, %s115
      %s119 = sphi 0, %s118
      %s135 = sphi 0, %s119
    $region4: #{tpu_custom_call.1} parent=1 // loop_header_branch
      %19 = sbr.rel (%p17) target = $region8
    $region5: #{tpu_custom_call.1} parent=1 // loop_body
      %s21 = ssub.s32 %s16, 1
      %s22 = ssub.s32 %s16, 2
      %s23 = sadd.s32 %s16, 1
      %s24 = ssub.s32 %s16, %s23
      %p25 = scmp.eq.s32.totalorder %s24, 0
      %s27 = sadd.s32 %s26, 1
      %s28 = scalar_select %p25, %s26, %s27
      %p31 = pneg %p25
      %p32 = scmp.eq.s32.totalorder %s16, 1
      %p33 = por %p31, %p32
      %p34 = scmp.ne.s32.totalorder %s26, %s29
      %p35 = scmp.eq.s32.totalorder %s16, 0
      %p36 = por %p34, %p35
      %p37 = scmp.ne.s32.totalorder %s26, %s29
      %p38 = scmp.eq.s32.totalorder %s21, 1
      %p39 = por %p37, %p38
      %p40 = scmp.ne.s32.totalorder %s29, %s30
      %p41 = scmp.eq.s32.totalorder %s21, 0
      %p42 = por %p40, %p41
      %p43 = scmp.ne.s32.totalorder %s29, %s30
      %p44 = scmp.eq.s32.totalorder %s22, 1
      %p45 = por %p43, %p44
      %p47 = scmp.ne.s32.totalorder %s30, %s46
      %p48 = scmp.eq.s32.totalorder %s22, 0
      %p49 = por %p47, %p48
      %s51 = sadd.s32 %s50, 1
      %p54 = scmp.eq.s32.totalorder %s16, 1
      %p55 = scmp.ne.s32.totalorder %s50, %s52
      %p56 = scmp.eq.s32.totalorder %s16, 0
      %p57 = por %p55, %p56
      %p58 = scmp.ne.s32.totalorder %s50, %s52
      %p59 = scmp.eq.s32.totalorder %s21, 1
      %p60 = por %p58, %p59
      %p61 = scmp.ne.s32.totalorder %s52, %s53
      %p62 = scmp.eq.s32.totalorder %s21, 0
      %p63 = por %p61, %p62
      %p64 = scmp.ne.s32.totalorder %s52, %s53
      %p65 = scmp.eq.s32.totalorder %s22, 1
      %p66 = por %p64, %p65
      %p68 = scmp.ne.s32.totalorder %s53, %s67
      %p69 = scmp.eq.s32.totalorder %s22, 0
      %p70 = por %p68, %p69
      %s72 = sadd.s32 %s71, 1
      %p75 = scmp.eq.s32.totalorder %s16, 1
      %p76 = scmp.ne.s32.totalorder %s71, %s73
      %p77 = scmp.eq.s32.totalorder %s16, 0
      %p78 = por %p76, %p77
      %p79 = scmp.ne.s32.totalorder %s71, %s73
      %p80 = scmp.eq.s32.totalorder %s21, 1
      %p81 = por %p79, %p80
      %p82 = scmp.ne.s32.totalorder %s73, %s74
      %p83 = scmp.eq.s32.totalorder %s21, 0
      %p84 = por %p82, %p83
      %p85 = scmp.ne.s32.totalorder %s73, %s74
      %p86 = scmp.eq.s32.totalorder %s22, 1
      %p87 = por %p85, %p86
      %p89 = scmp.ne.s32.totalorder %s74, %s88
      %p90 = scmp.eq.s32.totalorder %s22, 0
      %p91 = por %p89, %p90
      %s93 = sadd.s32 %s92, 1
      %p96 = scmp.eq.s32.totalorder %s16, 1
      %p97 = scmp.ne.s32.totalorder %s92, %s94
      %p98 = scmp.eq.s32.totalorder %s16, 0
      %p99 = por %p97, %p98
      %p100 = scmp.ne.s32.totalorder %s92, %s94
      %p101 = scmp.eq.s32.totalorder %s21, 1
      %p102 = por %p100, %p101
      %p103 = scmp.ne.s32.totalorder %s94, %s95
      %p104 = scmp.eq.s32.totalorder %s21, 0
      %p105 = por %p103, %p104
      %p106 = scmp.ne.s32.totalorder %s94, %s95
      %p107 = scmp.eq.s32.totalorder %s22, 1
      %p108 = por %p106, %p107
      %p110 = scmp.ne.s32.totalorder %s95, %s109
      %p111 = scmp.eq.s32.totalorder %s22, 0
      %p112 = por %p110, %p111
      %s113 = ssub.s32 %s16, %s23
      %p114 = scmp.eq.s32.totalorder %s113, 0
      %s116 = sadd.s32 %s115, 1
      %s117 = scalar_select %p114, %s115, %s116
      %p120 = pneg %p114
      %p121 = scmp.eq.s32.totalorder %s16, 1
      %p122 = por %p120, %p121
      %p123 = scmp.ne.s32.totalorder %s115, %s118
      %p124 = scmp.eq.s32.totalorder %s16, 0
      %p125 = por %p123, %p124
      %p126 = scmp.ne.s32.totalorder %s115, %s118
      %p127 = scmp.eq.s32.totalorder %s21, 1
      %p128 = por %p126, %p127
      %p129 = scmp.ne.s32.totalorder %s118, %s119
      %p130 = scmp.eq.s32.totalorder %s21, 0
      %p131 = por %p129, %p130
      %p132 = scmp.ne.s32.totalorder %s118, %s119
      %p133 = scmp.eq.s32.totalorder %s22, 1
      %p134 = por %p132, %p133
      %p136 = scmp.ne.s32.totalorder %s119, %s135
      %p137 = scmp.eq.s32.totalorder %s22, 0
      %p138 = por %p136, %p137
      %p139 = scmp.le.s32.totalorder 1, %s16
      %p140 = scmp.lt.s32.totalorder %s16, 3
      %p141 = pnand %p139, %p140
      %p142 = pneg %p141
      // Predicated region
      $region9: #{tpu_custom_call.1} parent=5 // pred_check
        _
      $region10: #{tpu_custom_call.1} parent=5 // pred_check_branch
        %144 = sbr.rel (%p141) target = $region12
      $region11: #{tpu_custom_call.1} parent=5 // pred_region
        %s145 = ssub.s32 %s16, 1
        // Predicated region
        $region13: #{tpu_custom_call.1} parent=11 // pred_check
          %p146 = pneg %p63
        $region14: #{tpu_custom_call.1} parent=11 // pred_check_branch
          %148 = sbr.rel (%p146) target = $region16
        $region15: #{tpu_custom_call.1} parent=11 // pred_region
          _
        $region16: #{tpu_custom_call.1} parent=11 // pred_fallthru
          _
        // Predicated region
        $region17: #{tpu_custom_call.1} parent=11 // pred_check
          %p149 = pneg %p84
        $region18: #{tpu_custom_call.1} parent=11 // pred_check_branch
          %151 = sbr.rel (%p149) target = $region20
        $region19: #{tpu_custom_call.1} parent=11 // pred_region
          _
        $region20: #{tpu_custom_call.1} parent=11 // pred_fallthru
          _
        // Predicated region
        $region21: #{tpu_custom_call.1} parent=11 // pred_check
          %p152 = pneg %p105
        $region22: #{tpu_custom_call.1} parent=11 // pred_check_branch
          %154 = sbr.rel (%p152) target = $region24
        $region23: #{tpu_custom_call.1} parent=11 // pred_region
          _
        $region24: #{tpu_custom_call.1} parent=11 // pred_fallthru
          _
      $region12: #{tpu_custom_call.1} parent=5 // pred_fallthru
        _
      %p155 = scmp.lt.s32.totalorder %s16, 2
      // Predicated region
      $region25: #{tpu_custom_call.1} parent=5 // pred_check
        %p156 = pneg %p155
      $region26: #{tpu_custom_call.1} parent=5 // pred_check_branch
        %158 = sbr.rel (%p156) target = $region28
      $region27: #{tpu_custom_call.1} parent=5 // pred_region
        // Predicated region
        $region29: #{tpu_custom_call.1} parent=27 // pred_check
          %p159 = pneg %p36
        $region30: #{tpu_custom_call.1} parent=27 // pred_check_branch
          %161 = sbr.rel (%p159) target = $region32
        $region31: #{tpu_custom_call.1} parent=27 // pred_region
          %s162 = sand.u32 %s26, 1
          %s163 = scalar_lea.sflag [#allocation3], %s162
          %s164 = sand.u32 %s26, 1
          %s165 = smul.addr %s164, 64
          %s166 = scalar_lea.vmem [#allocation2], %s165
          %s168 = ssub.s32 1024, 1024
          %169 = vsyncadd %s163, %s168
          %s170 = smul.addr %s16, 16
          %s171 = smul.addr %s170, 64
          %s172 = scalar_lea.hbm %s0, %s171
          %s173 = sshll.u32 %s166, 4
          %s174 = int_to_ptr.vmem [resolvable:$true] %s173
          %179 = dma.hbm_to_vmem [thread:$0]  %s172, 1024, %s174, %s163, 128, 128, 8
        $region32: #{tpu_custom_call.1} parent=27 // pred_fallthru
          _
      $region28: #{tpu_custom_call.1} parent=5 // pred_fallthru
        _
      %p180 = scmp.le.s32.totalorder 1, %s16
      %p181 = scmp.lt.s32.totalorder %s16, 3
      %p182 = pnand %p180, %p181
      %p183 = pneg %p182
      // Predicated region
      $region33: #{tpu_custom_call.1} parent=5 // pred_check
        _
      $region34: #{tpu_custom_call.1} parent=5 // pred_check_branch
        %185 = sbr.rel (%p182) target = $region36
      $region35: #{tpu_custom_call.1} parent=5 // pred_region
        %s186 = ssub.s32 %s16, 1
        %s187 = sand.u32 %s29, 1
        %s188 = scalar_lea.sflag [#allocation3], %s187
        %s189 = sand.u32 %s29, 1
        %s190 = smul.addr %s189, 64
        %s191 = scalar_lea.vmem [#allocation2], %s190
        // Predicated region
        $region37: #{tpu_custom_call.1} parent=35 // pred_check
          %p192 = pneg %p42
        $region38: #{tpu_custom_call.1} parent=35 // pred_check_branch
          %194 = sbr.rel (%p192) target = $region40
        $region39: #{tpu_custom_call.1} parent=35 // pred_region
          %195 = dma.done %s188, 1024
        $region40: #{tpu_custom_call.1} parent=35 // pred_fallthru
          _
        %s196 = sand.u32 %s29, 1
        %s197 = scalar_lea.sflag [#allocation3], %s196
        %s198 = sand.u32 %s29, 1
        %s199 = smul.addr %s198, 64
        %s200 = scalar_lea.vmem [#allocation2], %s199
        %p201 = pneg %p42
        %p202 = pneg %p39
        %p203 = pneg %p63
        %p204 = pneg %p60
        %p205 = pneg %p84
        %p206 = pneg %p81
        %p207 = pneg %p105
        %p208 = pneg %p102
        %p209 = pneg %p131
        %p210 = pneg %p128
        %s211 = sand.u32 %s118, 1
        %s212 = scalar_lea.sflag [#allocation4], %s211
        %s213 = sand.u32 %s118, 1
        %s214 = smul.addr %s213, 64
        %s215 = scalar_lea.vmem [#allocation5], %s214
        %v216 = vld [vmem:[%s191] sm:$0xff]
        %v217 = vld [vmem:[%s191 + $0x8] sm:$0xff]
        %v218 = vld [vmem:[%s191 + $0x10] sm:$0xff]
        %v219 = vld [vmem:[%s191 + $0x18] sm:$0xff]
        %v220 = vld [vmem:[%s191 + $0x20] sm:$0xff]
        %v221 = vld [vmem:[%s191 + $0x28] sm:$0xff]
        %v222 = vld [vmem:[%s191 + $0x30] sm:$0xff]
        %v223 = vld [vmem:[%s191 + $0x38] sm:$0xff]
        %v232 = vcombine.high %v216, %v216
        %v233 = vcombine.high %v217, %v217
        %v234 = vcombine.high %v218, %v218
        %v235 = vcombine.high %v219, %v219
        %v236 = vcombine.high %v220, %v220
        %v237 = vcombine.high %v221, %v221
        %v238 = vcombine.high %v222, %v222
        %v239 = vcombine.high %v223, %v223
        %vm248 = vcmask 1043456
        %v249 = vsel %vm248, %v216, 0.0
        %v250 = vsel %vm248, %v232, 0.0
        %v251 = vadd.f32 %v249, %v250
        %252 = vadd.xlane.f32.xlu0 %v251
        %v253 = vpop.xlane.xlu0 %252
        %v254 = vsel %vm248, %v217, 0.0
        %v255 = vsel %vm248, %v233, 0.0
        %v256 = vadd.f32 %v254, %v255
        %257 = vadd.xlane.f32.xlu0 %v256
        %v258 = vpop.xlane.xlu0 %257
        %v259 = vsel %vm248, %v218, 0.0
        %v260 = vsel %vm248, %v234, 0.0
        %v261 = vadd.f32 %v259, %v260
        %262 = vadd.xlane.f32.xlu0 %v261
        %v263 = vpop.xlane.xlu0 %262
        %v264 = vsel %vm248, %v219, 0.0
        %v265 = vsel %vm248, %v235, 0.0
        %v266 = vadd.f32 %v264, %v265
        %267 = vadd.xlane.f32.xlu0 %v266
        %v268 = vpop.xlane.xlu0 %267
        %v269 = vsel %vm248, %v220, 0.0
        %v270 = vsel %vm248, %v236, 0.0
        %v271 = vadd.f32 %v269, %v270
        %272 = vadd.xlane.f32.xlu0 %v271
        %v273 = vpop.xlane.xlu0 %272
        %v274 = vsel %vm248, %v221, 0.0
        %v275 = vsel %vm248, %v237, 0.0
        %v276 = vadd.f32 %v274, %v275
        %277 = vadd.xlane.f32.xlu0 %v276
        %v278 = vpop.xlane.xlu0 %277
        %v279 = vsel %vm248, %v222, 0.0
        %v280 = vsel %vm248, %v238, 0.0
        %v281 = vadd.f32 %v279, %v280
        %282 = vadd.xlane.f32.xlu0 %v281
        %v283 = vpop.xlane.xlu0 %282
        %v284 = vsel %vm248, %v223, 0.0
        %v285 = vsel %vm248, %v239, 0.0
        %v286 = vadd.f32 %v284, %v285
        %287 = vadd.xlane.f32.xlu0 %v286
        %v288 = vpop.xlane.xlu0 %287
        %v289 = vsel %vm248, %v253, 0.0
        %v290 = vrot.slane %v289, 4
        %v291 = vadd.f32 %v289, %v290
        %v292 = vrot.slane %v291, 2
        %v293 = vadd.f32 %v291, %v292
        %v294 = vrot.slane %v293, 1
        %v295 = vadd.f32 %v293, %v294
        %v296 = vsel %vm248, %v258, 0.0
        %v297 = vrot.slane %v296, 4
        %v298 = vadd.f32 %v296, %v297
        %v299 = vrot.slane %v298, 2
        %v300 = vadd.f32 %v298, %v299
        %v301 = vrot.slane %v300, 1
        %v302 = vadd.f32 %v300, %v301
        %v303 = vsel %vm248, %v263, 0.0
        %v304 = vrot.slane %v303, 4
        %v305 = vadd.f32 %v303, %v304
        %v306 = vrot.slane %v305, 2
        %v307 = vadd.f32 %v305, %v306
        %v308 = vrot.slane %v307, 1
        %v309 = vadd.f32 %v307, %v308
        %v310 = vsel %vm248, %v268, 0.0
        %v311 = vrot.slane %v310, 4
        %v312 = vadd.f32 %v310, %v311
        %v313 = vrot.slane %v312, 2
        %v314 = vadd.f32 %v312, %v313
        %v315 = vrot.slane %v314, 1
        %v316 = vadd.f32 %v314, %v315
        %v317 = vsel %vm248, %v273, 0.0
        %v318 = vrot.slane %v317, 4
        %v319 = vadd.f32 %v317, %v318
        %v320 = vrot.slane %v319, 2
        %v321 = vadd.f32 %v319, %v320
        %v322 = vrot.slane %v321, 1
        %v323 = vadd.f32 %v321, %v322
        %v324 = vsel %vm248, %v278, 0.0
        %v325 = vrot.slane %v324, 4
        %v326 = vadd.f32 %v324, %v325
        %v327 = vrot.slane %v326, 2
        %v328 = vadd.f32 %v326, %v327
        %v329 = vrot.slane %v328, 1
        %v330 = vadd.f32 %v328, %v329
        %v331 = vsel %vm248, %v283, 0.0
        %v332 = vrot.slane %v331, 4
        %v333 = vadd.f32 %v331, %v332
        %v334 = vrot.slane %v333, 2
        %v335 = vadd.f32 %v333, %v334
        %v336 = vrot.slane %v335, 1
        %v337 = vadd.f32 %v335, %v336
        %v338 = vsel %vm248, %v288, 0.0
        %v339 = vrot.slane %v338, 4
        %v340 = vadd.f32 %v338, %v339
        %v341 = vrot.slane %v340, 2
        %v342 = vadd.f32 %v340, %v341
        %v343 = vrot.slane %v342, 1
        %v344 = vadd.f32 %v342, %v343
        %v345 = vmul.f32 %v295, 0.0009765625
        %v346 = vmul.f32 %v302, 0.0009765625
        %v347 = vmul.f32 %v309, 0.0009765625
        %v348 = vmul.f32 %v316, 0.0009765625
        %v349 = vmul.f32 %v323, 0.0009765625
        %v350 = vmul.f32 %v330, 0.0009765625
        %v351 = vmul.f32 %v337, 0.0009765625
        %v352 = vmul.f32 %v344, 0.0009765625
        %v353 = vsub.f32 %v216, %v345
        %v354 = vsub.f32 %v217, %v346
        %v355 = vsub.f32 %v218, %v347
        %v356 = vsub.f32 %v219, %v348
        %v357 = vsub.f32 %v220, %v349
        %v358 = vsub.f32 %v221, %v350
        %v359 = vsub.f32 %v222, %v351
        %v360 = vsub.f32 %v223, %v352
        %v361 = vmul.f32 %v353, %v353
        %v362 = vmul.f32 %v354, %v354
        %v363 = vmul.f32 %v355, %v355
        %v364 = vmul.f32 %v356, %v356
        %v365 = vmul.f32 %v357, %v357
        %v366 = vmul.f32 %v358, %v358
        %v367 = vmul.f32 %v359, %v359
        %v368 = vmul.f32 %v360, %v360
        %v377 = vcombine.high %v361, %v361
        %v378 = vcombine.high %v362, %v362
        %v379 = vcombine.high %v363, %v363
        %v380 = vcombine.high %v364, %v364
        %v381 = vcombine.high %v365, %v365
        %v382 = vcombine.high %v366, %v366
        %v383 = vcombine.high %v367, %v367
        %v384 = vcombine.high %v368, %v368
        %v393 = vsel %vm248, %v361, 0.0
        %v394 = vsel %vm248, %v377, 0.0
        %v395 = vadd.f32 %v393, %v394
        %396 = vadd.xlane.f32.xlu0 %v395
        %v397 = vpop.xlane.xlu0 %396
        %v398 = vsel %vm248, %v362, 0.0
        %v399 = vsel %vm248, %v378, 0.0
        %v400 = vadd.f32 %v398, %v399
        %401 = vadd.xlane.f32.xlu0 %v400
        %v402 = vpop.xlane.xlu0 %401
        %v403 = vsel %vm248, %v363, 0.0
        %v404 = vsel %vm248, %v379, 0.0
        %v405 = vadd.f32 %v403, %v404
        %406 = vadd.xlane.f32.xlu0 %v405
        %v407 = vpop.xlane.xlu0 %406
        %v408 = vsel %vm248, %v364, 0.0
        %v409 = vsel %vm248, %v380, 0.0
        %v410 = vadd.f32 %v408, %v409
        %411 = vadd.xlane.f32.xlu0 %v410
        %v412 = vpop.xlane.xlu0 %411
        %v413 = vsel %vm248, %v365, 0.0
        %v414 = vsel %vm248, %v381, 0.0
        %v415 = vadd.f32 %v413, %v414
        %416 = vadd.xlane.f32.xlu0 %v415
        %v417 = vpop.xlane.xlu0 %416
        %v418 = vsel %vm248, %v366, 0.0
        %v419 = vsel %vm248, %v382, 0.0
        %v420 = vadd.f32 %v418, %v419
        %421 = vadd.xlane.f32.xlu0 %v420
        %v422 = vpop.xlane.xlu0 %421
        %v423 = vsel %vm248, %v367, 0.0
        %v424 = vsel %vm248, %v383, 0.0
        %v425 = vadd.f32 %v423, %v424
        %426 = vadd.xlane.f32.xlu0 %v425
        %v427 = vpop.xlane.xlu0 %426
        %v428 = vsel %vm248, %v368, 0.0
        %v429 = vsel %vm248, %v384, 0.0
        %v430 = vadd.f32 %v428, %v429
        %431 = vadd.xlane.f32.xlu0 %v430
        %v432 = vpop.xlane.xlu0 %431
        %v433 = vsel %vm248, %v397, 0.0
        %v434 = vrot.slane %v433, 4
        %v435 = vadd.f32 %v433, %v434
        %v436 = vrot.slane %v435, 2
        %v437 = vadd.f32 %v435, %v436
        %v438 = vrot.slane %v437, 1
        %v439 = vadd.f32 %v437, %v438
        %v440 = vsel %vm248, %v402, 0.0
        %v441 = vrot.slane %v440, 4
        %v442 = vadd.f32 %v440, %v441
        %v443 = vrot.slane %v442, 2
        %v444 = vadd.f32 %v442, %v443
        %v445 = vrot.slane %v444, 1
        %v446 = vadd.f32 %v444, %v445
        %v447 = vsel %vm248, %v407, 0.0
        %v448 = vrot.slane %v447, 4
        %v449 = vadd.f32 %v447, %v448
        %v450 = vrot.slane %v449, 2
        %v451 = vadd.f32 %v449, %v450
        %v452 = vrot.slane %v451, 1
        %v453 = vadd.f32 %v451, %v452
        %v454 = vsel %vm248, %v412, 0.0
        %v455 = vrot.slane %v454, 4
        %v456 = vadd.f32 %v454, %v455
        %v457 = vrot.slane %v456, 2
        %v458 = vadd.f32 %v456, %v457
        %v459 = vrot.slane %v458, 1
        %v460 = vadd.f32 %v458, %v459
        %v461 = vsel %vm248, %v417, 0.0
        %v462 = vrot.slane %v461, 4
        %v463 = vadd.f32 %v461, %v462
        %v464 = vrot.slane %v463, 2
        %v465 = vadd.f32 %v463, %v464
        %v466 = vrot.slane %v465, 1
        %v467 = vadd.f32 %v465, %v466
        %v468 = vsel %vm248, %v422, 0.0
        %v469 = vrot.slane %v468, 4
        %v470 = vadd.f32 %v468, %v469
        %v471 = vrot.slane %v470, 2
        %v472 = vadd.f32 %v470, %v471
        %v473 = vrot.slane %v472, 1
        %v474 = vadd.f32 %v472, %v473
        %v475 = vsel %vm248, %v427, 0.0
        %v476 = vrot.slane %v475, 4
        %v477 = vadd.f32 %v475, %v476
        %v478 = vrot.slane %v477, 2
        %v479 = vadd.f32 %v477, %v478
        %v480 = vrot.slane %v479, 1
        %v481 = vadd.f32 %v479, %v480
        %v482 = vsel %vm248, %v432, 0.0
        %v483 = vrot.slane %v482, 4
        %v484 = vadd.f32 %v482, %v483
        %v485 = vrot.slane %v484, 2
        %v486 = vadd.f32 %v484, %v485
        %v487 = vrot.slane %v486, 1
        %v488 = vadd.f32 %v486, %v487
        %v489 = vmul.f32 %v439, 0.0009775171
        %v490 = vmul.f32 %v446, 0.0009775171
        %v491 = vmul.f32 %v453, 0.0009775171
        %v492 = vmul.f32 %v460, 0.0009775171
        %v493 = vmul.f32 %v467, 0.0009775171
        %v494 = vmul.f32 %v474, 0.0009775171
        %v495 = vmul.f32 %v481, 0.0009775171
        %v496 = vmul.f32 %v488, 0.0009775171
        %v497 = vadd.f32 %v489, 1e-05
        %v498 = vadd.f32 %v490, 1e-05
        %v499 = vadd.f32 %v491, 1e-05
        %v500 = vadd.f32 %v492, 1e-05
        %v501 = vadd.f32 %v493, 1e-05
        %v502 = vadd.f32 %v494, 1e-05
        %v503 = vadd.f32 %v495, 1e-05
        %v504 = vadd.f32 %v496, 1e-05
        %v505 = vrsqrt.pop %v497
        %v506 = vrsqrt.pop %v498
        %v507 = vrsqrt.pop %v499
        %v508 = vrsqrt.pop %v500
        %v509 = vrsqrt.pop %v501
        %v510 = vrsqrt.pop %v502
        %v511 = vrsqrt.pop %v503
        %v512 = vrsqrt.pop %v504
        %v513 = vld [vmem:[%s1] sm:$0xf]
        %v514 = vld [vmem:[%s1 + $0x4] sm:$0xf]
        %v515 = vld [vmem:[%s1 + $0x8] sm:$0xf]
        %v516 = vld [vmem:[%s1 + $0xc] sm:$0xf]
        %v517 = vld [vmem:[%s1 + $0x10] sm:$0xf]
        %v518 = vld [vmem:[%s1 + $0x14] sm:$0xf]
        %v519 = vld [vmem:[%s1 + $0x18] sm:$0xf]
        %v520 = vld [vmem:[%s1 + $0x1c] sm:$0xf]
        %v521 = vld [vmem:[%s2] sm:$0xf]
        %v522 = vld [vmem:[%s2 + $0x4] sm:$0xf]
        %v523 = vld [vmem:[%s2 + $0x8] sm:$0xf]
        %v524 = vld [vmem:[%s2 + $0xc] sm:$0xf]
        %v525 = vld [vmem:[%s2 + $0x10] sm:$0xf]
        %v526 = vld [vmem:[%s2 + $0x14] sm:$0xf]
        %v527 = vld [vmem:[%s2 + $0x18] sm:$0xf]
        %v528 = vld [vmem:[%s2 + $0x1c] sm:$0xf]
        %v529 = vld [vmem:[%s3] sm:$0xf]
        %v530 = vld [vmem:[%s3 + $0x4] sm:$0xf]
        %v531 = vld [vmem:[%s3 + $0x8] sm:$0xf]
        %v532 = vld [vmem:[%s3 + $0xc] sm:$0xf]
        %v533 = vld [vmem:[%s3 + $0x10] sm:$0xf]
        %v534 = vld [vmem:[%s3 + $0x14] sm:$0xf]
        %v535 = vld [vmem:[%s3 + $0x18] sm:$0xf]
        %v536 = vld [vmem:[%s3 + $0x1c] sm:$0xf]
        %538 = vset.pattern.permute.xlu0 0
        %539 = vperm.xlu0 %538, %v513
        %v540 = vpop.permute.xlu0 %539
        %543 = vset.pattern.permute.xlu0 0
        %544 = vperm.xlu0 %543, %v514
        %v545 = vpop.permute.xlu0 %544
        %548 = vset.pattern.permute.xlu0 0
        %549 = vperm.xlu0 %548, %v515
        %v550 = vpop.permute.xlu0 %549
        %553 = vset.pattern.permute.xlu0 0
        %554 = vperm.xlu0 %553, %v516
        %v555 = vpop.permute.xlu0 %554
        %558 = vset.pattern.permute.xlu0 0
        %559 = vperm.xlu0 %558, %v517
        %v560 = vpop.permute.xlu0 %559
        %563 = vset.pattern.permute.xlu0 0
        %564 = vperm.xlu0 %563, %v518
        %v565 = vpop.permute.xlu0 %564
        %568 = vset.pattern.permute.xlu0 0
        %569 = vperm.xlu0 %568, %v519
        %v570 = vpop.permute.xlu0 %569
        %573 = vset.pattern.permute.xlu0 0
        %574 = vperm.xlu0 %573, %v520
        %v575 = vpop.permute.xlu0 %574
        %v577 = vmul.f32 %v540, %v216
        %v578 = vmul.f32 %v540, %v232
        %v579 = vmul.f32 %v545, %v217
        %v580 = vmul.f32 %v545, %v233
        %v581 = vmul.f32 %v550, %v218
        %v582 = vmul.f32 %v550, %v234
        %v583 = vmul.f32 %v555, %v219
        %v584 = vmul.f32 %v555, %v235
        %v585 = vmul.f32 %v560, %v220
        %v586 = vmul.f32 %v560, %v236
        %v587 = vmul.f32 %v565, %v221
        %v588 = vmul.f32 %v565, %v237
        %v589 = vmul.f32 %v570, %v222
        %v590 = vmul.f32 %v570, %v238
        %v591 = vmul.f32 %v575, %v223
        %v592 = vmul.f32 %v575, %v239
        %v593 = vsub.f32 0.0, %v577
        %v594 = vsub.f32 0.0, %v578
        %v595 = vsub.f32 0.0, %v579
        %v596 = vsub.f32 0.0, %v580
        %v597 = vsub.f32 0.0, %v581
        %v598 = vsub.f32 0.0, %v582
        %v599 = vsub.f32 0.0, %v583
        %v600 = vsub.f32 0.0, %v584
        %v601 = vsub.f32 0.0, %v585
        %v602 = vsub.f32 0.0, %v586
        %v603 = vsub.f32 0.0, %v587
        %v604 = vsub.f32 0.0, %v588
        %v605 = vsub.f32 0.0, %v589
        %v606 = vsub.f32 0.0, %v590
        %v607 = vsub.f32 0.0, %v591
        %v608 = vsub.f32 0.0, %v592
        %v609 = vmul.f32 %v593, 1.442695
        %v610 = vpow.pop %v609
        %v611 = vmul.f32 %v594, 1.442695
        %v612 = vpow.pop %v611
        %v613 = vmul.f32 %v595, 1.442695
        %v614 = vpow.pop %v613
        %v615 = vmul.f32 %v596, 1.442695
        %v616 = vpow.pop %v615
        %v617 = vmul.f32 %v597, 1.442695
        %v618 = vpow.pop %v617
        %v619 = vmul.f32 %v598, 1.442695
        %v620 = vpow.pop %v619
        %v621 = vmul.f32 %v599, 1.442695
        %v622 = vpow.pop %v621
        %v623 = vmul.f32 %v600, 1.442695
        %v624 = vpow.pop %v623
        %v625 = vmul.f32 %v601, 1.442695
        %v626 = vpow.pop %v625
        %v627 = vmul.f32 %v602, 1.442695
        %v628 = vpow.pop %v627
        %v629 = vmul.f32 %v603, 1.442695
        %v630 = vpow.pop %v629
        %v631 = vmul.f32 %v604, 1.442695
        %v632 = vpow.pop %v631
        %v633 = vmul.f32 %v605, 1.442695
        %v634 = vpow.pop %v633
        %v635 = vmul.f32 %v606, 1.442695
        %v636 = vpow.pop %v635
        %v637 = vmul.f32 %v607, 1.442695
        %v638 = vpow.pop %v637
        %v639 = vmul.f32 %v608, 1.442695
        %v640 = vpow.pop %v639
        %v641 = vadd.f32 %v610, 1.0
        %v642 = vadd.f32 %v612, 1.0
        %v643 = vadd.f32 %v614, 1.0
        %v644 = vadd.f32 %v616, 1.0
        %v645 = vadd.f32 %v618, 1.0
        %v646 = vadd.f32 %v620, 1.0
        %v647 = vadd.f32 %v622, 1.0
        %v648 = vadd.f32 %v624, 1.0
        %v649 = vadd.f32 %v626, 1.0
        %v650 = vadd.f32 %v628, 1.0
        %v651 = vadd.f32 %v630, 1.0
        %v652 = vadd.f32 %v632, 1.0
        %v653 = vadd.f32 %v634, 1.0
        %v654 = vadd.f32 %v636, 1.0
        %v655 = vadd.f32 %v638, 1.0
        %v656 = vadd.f32 %v640, 1.0
        %v657 = vrcp.pop %v641
        %v658 = vmul.f32 1.0, %v657
        %v659 = vrcp.pop %v642
        %v660 = vmul.f32 1.0, %v659
        %v661 = vrcp.pop %v643
        %v662 = vmul.f32 1.0, %v661
        %v663 = vrcp.pop %v644
        %v664 = vmul.f32 1.0, %v663
        %v665 = vrcp.pop %v645
        %v666 = vmul.f32 1.0, %v665
        %v667 = vrcp.pop %v646
        %v668 = vmul.f32 1.0, %v667
        %v669 = vrcp.pop %v647
        %v670 = vmul.f32 1.0, %v669
        %v671 = vrcp.pop %v648
        %v672 = vmul.f32 1.0, %v671
        %v673 = vrcp.pop %v649
        %v674 = vmul.f32 1.0, %v673
        %v675 = vrcp.pop %v650
        %v676 = vmul.f32 1.0, %v675
        %v677 = vrcp.pop %v651
        %v678 = vmul.f32 1.0, %v677
        %v679 = vrcp.pop %v652
        %v680 = vmul.f32 1.0, %v679
        %v681 = vrcp.pop %v653
        %v682 = vmul.f32 1.0, %v681
        %v683 = vrcp.pop %v654
        %v684 = vmul.f32 1.0, %v683
        %v685 = vrcp.pop %v655
        %v686 = vmul.f32 1.0, %v685
        %v687 = vrcp.pop %v656
        %v688 = vmul.f32 1.0, %v687
        %v705 = vcombine.low %v658, %v660
        %v706 = vcombine.low %v662, %v664
        %v707 = vcombine.low %v666, %v668
        %v708 = vcombine.low %v670, %v672
        %v709 = vcombine.low %v674, %v676
        %v710 = vcombine.low %v678, %v680
        %v711 = vcombine.low %v682, %v684
        %v712 = vcombine.low %v686, %v688
        %v721 = vmul.f32 %v216, %v705
        %v722 = vmul.f32 %v217, %v706
        %v723 = vmul.f32 %v218, %v707
        %v724 = vmul.f32 %v219, %v708
        %v725 = vmul.f32 %v220, %v709
        %v726 = vmul.f32 %v221, %v710
        %v727 = vmul.f32 %v222, %v711
        %v728 = vmul.f32 %v223, %v712
        %v729 = vmul.f32 %v721, %v505
        %v730 = vmul.f32 %v722, %v506
        %v731 = vmul.f32 %v723, %v507
        %v732 = vmul.f32 %v724, %v508
        %v733 = vmul.f32 %v725, %v509
        %v734 = vmul.f32 %v726, %v510
        %v735 = vmul.f32 %v727, %v511
        %v736 = vmul.f32 %v728, %v512
        %738 = vset.pattern.permute.xlu0 0
        %739 = vperm.xlu0 %738, %v521
        %v740 = vpop.permute.xlu0 %739
        %742 = vset.pattern.permute.xlu0 0
        %743 = vperm.xlu0 %742, %v522
        %v744 = vpop.permute.xlu0 %743
        %746 = vset.pattern.permute.xlu0 0
        %747 = vperm.xlu0 %746, %v523
        %v748 = vpop.permute.xlu0 %747
        %750 = vset.pattern.permute.xlu0 0
        %751 = vperm.xlu0 %750, %v524
        %v752 = vpop.permute.xlu0 %751
        %754 = vset.pattern.permute.xlu0 0
        %755 = vperm.xlu0 %754, %v525
        %v756 = vpop.permute.xlu0 %755
        %758 = vset.pattern.permute.xlu0 0
        %759 = vperm.xlu0 %758, %v526
        %v760 = vpop.permute.xlu0 %759
        %762 = vset.pattern.permute.xlu0 0
        %763 = vperm.xlu0 %762, %v527
        %v764 = vpop.permute.xlu0 %763
        %766 = vset.pattern.permute.xlu0 0
        %767 = vperm.xlu0 %766, %v528
        %v768 = vpop.permute.xlu0 %767
        %v770 = vunpack.c.l.s4 839922192
        %v771 = vunpack.c.0.s8 %v770
        %v772 = vlaneseq
        %v773 = vshrl.u32 %v772, 7
        %v774 = vsub.s32 %v771, %v773
        %v775 = vrot.slane %v740, %v774
        %v777 = vunpack.c.l.s4 839922192
        %v778 = vunpack.c.0.s8 %v777
        %v779 = vlaneseq
        %v780 = vshrl.u32 %v779, 7
        %v781 = vsub.s32 %v778, %v780
        %v782 = vrot.slane %v744, %v781
        %v784 = vunpack.c.l.s4 839922192
        %v785 = vunpack.c.0.s8 %v784
        %v786 = vlaneseq
        %v787 = vshrl.u32 %v786, 7
        %v788 = vsub.s32 %v785, %v787
        %v789 = vrot.slane %v748, %v788
        %v791 = vunpack.c.l.s4 839922192
        %v792 = vunpack.c.0.s8 %v791
        %v793 = vlaneseq
        %v794 = vshrl.u32 %v793, 7
        %v795 = vsub.s32 %v792, %v794
        %v796 = vrot.slane %v752, %v795
        %v798 = vunpack.c.l.s4 839922192
        %v799 = vunpack.c.0.s8 %v798
        %v800 = vlaneseq
        %v801 = vshrl.u32 %v800, 7
        %v802 = vsub.s32 %v799, %v801
        %v803 = vrot.slane %v756, %v802
        %v805 = vunpack.c.l.s4 839922192
        %v806 = vunpack.c.0.s8 %v805
        %v807 = vlaneseq
        %v808 = vshrl.u32 %v807, 7
        %v809 = vsub.s32 %v806, %v808
        %v810 = vrot.slane %v760, %v809
        %v812 = vunpack.c.l.s4 839922192
        %v813 = vunpack.c.0.s8 %v812
        %v814 = vlaneseq
        %v815 = vshrl.u32 %v814, 7
        %v816 = vsub.s32 %v813, %v815
        %v817 = vrot.slane %v764, %v816
        %v819 = vunpack.c.l.s4 839922192
        %v820 = vunpack.c.0.s8 %v819
        %v821 = vlaneseq
        %v822 = vshrl.u32 %v821, 7
        %v823 = vsub.s32 %v820, %v822
        %v824 = vrot.slane %v768, %v823
        %v833 = vmul.f32 %v729, %v775
        %v834 = vmul.f32 %v730, %v782
        %v835 = vmul.f32 %v731, %v789
        %v836 = vmul.f32 %v732, %v796
        %v837 = vmul.f32 %v733, %v803
        %v838 = vmul.f32 %v734, %v810
        %v839 = vmul.f32 %v735, %v817
        %v840 = vmul.f32 %v736, %v824
        %842 = vset.pattern.permute.xlu0 0
        %843 = vperm.xlu0 %842, %v529
        %v844 = vpop.permute.xlu0 %843
        %846 = vset.pattern.permute.xlu0 0
        %847 = vperm.xlu0 %846, %v530
        %v848 = vpop.permute.xlu0 %847
        %850 = vset.pattern.permute.xlu0 0
        %851 = vperm.xlu0 %850, %v531
        %v852 = vpop.permute.xlu0 %851
        %854 = vset.pattern.permute.xlu0 0
        %855 = vperm.xlu0 %854, %v532
        %v856 = vpop.permute.xlu0 %855
        %858 = vset.pattern.permute.xlu0 0
        %859 = vperm.xlu0 %858, %v533
        %v860 = vpop.permute.xlu0 %859
        %862 = vset.pattern.permute.xlu0 0
        %863 = vperm.xlu0 %862, %v534
        %v864 = vpop.permute.xlu0 %863
        %866 = vset.pattern.permute.xlu0 0
        %867 = vperm.xlu0 %866, %v535
        %v868 = vpop.permute.xlu0 %867
        %870 = vset.pattern.permute.xlu0 0
        %871 = vperm.xlu0 %870, %v536
        %v872 = vpop.permute.xlu0 %871
        %v874 = vunpack.c.l.s4 839922192
        %v875 = vunpack.c.0.s8 %v874
        %v876 = vlaneseq
        %v877 = vshrl.u32 %v876, 7
        %v878 = vsub.s32 %v875, %v877
        %v879 = vrot.slane %v844, %v878
        %v881 = vunpack.c.l.s4 839922192
        %v882 = vunpack.c.0.s8 %v881
        %v883 = vlaneseq
        %v884 = vshrl.u32 %v883, 7
        %v885 = vsub.s32 %v882, %v884
        %v886 = vrot.slane %v848, %v885
        %v888 = vunpack.c.l.s4 839922192
        %v889 = vunpack.c.0.s8 %v888
        %v890 = vlaneseq
        %v891 = vshrl.u32 %v890, 7
        %v892 = vsub.s32 %v889, %v891
        %v893 = vrot.slane %v852, %v892
        %v895 = vunpack.c.l.s4 839922192
        %v896 = vunpack.c.0.s8 %v895
        %v897 = vlaneseq
        %v898 = vshrl.u32 %v897, 7
        %v899 = vsub.s32 %v896, %v898
        %v900 = vrot.slane %v856, %v899
        %v902 = vunpack.c.l.s4 839922192
        %v903 = vunpack.c.0.s8 %v902
        %v904 = vlaneseq
        %v905 = vshrl.u32 %v904, 7
        %v906 = vsub.s32 %v903, %v905
        %v907 = vrot.slane %v860, %v906
        %v909 = vunpack.c.l.s4 839922192
        %v910 = vunpack.c.0.s8 %v909
        %v911 = vlaneseq
        %v912 = vshrl.u32 %v911, 7
        %v913 = vsub.s32 %v910, %v912
        %v914 = vrot.slane %v864, %v913
        %v916 = vunpack.c.l.s4 839922192
        %v917 = vunpack.c.0.s8 %v916
        %v918 = vlaneseq
        %v919 = vshrl.u32 %v918, 7
        %v920 = vsub.s32 %v917, %v919
        %v921 = vrot.slane %v868, %v920
        %v923 = vunpack.c.l.s4 839922192
        %v924 = vunpack.c.0.s8 %v923
        %v925 = vlaneseq
        %v926 = vshrl.u32 %v925, 7
        %v927 = vsub.s32 %v924, %v926
        %v928 = vrot.slane %v872, %v927
        %v937 = vadd.f32 %v833, %v879
        %v938 = vadd.f32 %v834, %v886
        %v939 = vadd.f32 %v835, %v893
        %v940 = vadd.f32 %v836, %v900
        %v941 = vadd.f32 %v837, %v907
        %v942 = vadd.f32 %v838, %v914
        %v943 = vadd.f32 %v839, %v921
        %v944 = vadd.f32 %v840, %v928
        %945 = vst [vmem:[%s215] sm:$0xff] %v937
        %946 = vst [vmem:[%s215 + $0x8] sm:$0xff] %v938
        %947 = vst [vmem:[%s215 + $0x10] sm:$0xff] %v939
        %948 = vst [vmem:[%s215 + $0x18] sm:$0xff] %v940
        %949 = vst [vmem:[%s215 + $0x20] sm:$0xff] %v941
        %950 = vst [vmem:[%s215 + $0x28] sm:$0xff] %v942
        %951 = vst [vmem:[%s215 + $0x30] sm:$0xff] %v943
        %952 = vst [vmem:[%s215 + $0x38] sm:$0xff] %v944
        %s953 = sand.u32 %s118, 1
        %s954 = scalar_lea.sflag [#allocation4], %s953
        %s955 = sand.u32 %s118, 1
        %s956 = smul.addr %s955, 64
        %s957 = scalar_lea.vmem [#allocation5], %s956
        // Predicated region
        $region41: #{tpu_custom_call.1} parent=35 // pred_check
          %p958 = pneg %p128
        $region42: #{tpu_custom_call.1} parent=35 // pred_check_branch
          %960 = sbr.rel (%p958) target = $region44
        $region43: #{tpu_custom_call.1} parent=35 // pred_region
          %s962 = ssub.s32 1024, 1024
          %963 = vsyncadd %s954, %s962
          %s964 = smul.addr %s21, 16
          %s965 = smul.addr %s964, 64
          %s966 = scalar_lea.hbm %s4, %s965
          %s967 = sshll.u32 %s957, 4
          %s968 = int_to_ptr.vmem [resolvable:$true] %s967
          %973 = dma.vmem_to_hbm [thread:$0]  %s968, 1024, %s966, %s954, 128, 128, 8
        $region44: #{tpu_custom_call.1} parent=35 // pred_fallthru
          _
      $region36: #{tpu_custom_call.1} parent=5 // pred_fallthru
        _
      %p974 = scmp.le.s32.totalorder 2, %s16
      // Predicated region
      $region45: #{tpu_custom_call.1} parent=5 // pred_check
        %p975 = pneg %p974
      $region46: #{tpu_custom_call.1} parent=5 // pred_check_branch
        %977 = sbr.rel (%p975) target = $region48
      $region47: #{tpu_custom_call.1} parent=5 // pred_region
        %s978 = ssub.s32 %s16, 2
        // Predicated region
        $region49: #{tpu_custom_call.1} parent=47 // pred_check
          %p979 = pneg %p134
        $region50: #{tpu_custom_call.1} parent=47 // pred_check_branch
          %981 = sbr.rel (%p979) target = $region52
        $region51: #{tpu_custom_call.1} parent=47 // pred_region
          %s982 = sand.u32 %s119, 1
          %s983 = scalar_lea.sflag [#allocation4], %s982
          %s984 = sand.u32 %s119, 1
          %s985 = smul.addr %s984, 64
          %s986 = scalar_lea.vmem [#allocation5], %s985
          %987 = dma.done %s983, 1024
        $region52: #{tpu_custom_call.1} parent=47 // pred_fallthru
          _
      $region48: #{tpu_custom_call.1} parent=5 // pred_fallthru
        _
    $region6: #{tpu_custom_call.1} parent=1 // loop_footer
      %s20 = sadd.s32 1, %s16
    $region7: #{tpu_custom_call.1} parent=1 // loop_footer_branch
      %15 = sbr.rel target = $region3
    $region8: #{tpu_custom_call.1} parent=1 // loop_exit
      _
    %988 = vsyncpa [#allocation3], 1
    %s989 = scalar_lea.sflag [#allocation3], 1
    %990 = vsyncpa %s989, 1
    %991 = vsyncpa [#allocation4], 1
    %s992 = scalar_lea.sflag [#allocation4], 1
    %993 = vsyncpa %s992, 1

</llo_original>
